<compile_context>
chip_gen: v5e
topology: v5e:2x2
jax: 0.10.0
libtpu: 0.0.40
codegen_flags: <defaults>
</compile_context>

<pallas_src>
import jax
import jax.numpy as jnp
from jax.experimental import pallas as pl
from jax.experimental.pallas import tpu as pltpu


# --------------------------------------------------------------------------
# Reconstruction tile kernel (reduction='none') + broadcast KL scalar.
#   mask * (x - t)^2 + (1 - mask) * (2 - 2*cos(x - t)),  mask = feat_idx != 2
# --------------------------------------------------------------------------
def _recon_kernel(kl_ref, mask_ref, x_ref, t_ref, o_ref):
    x = x_ref[...].astype(jnp.float32)
    t = t_ref[...].astype(jnp.float32)
    diff = x - t
    sq = diff * diff
    cosv = 2.0 - 2.0 * jnp.cos(diff)
    m = mask_ref[...]                         # (1, lane) f32, resident in VMEM
    recon = jnp.where(m != 0.0, sq, cosv)     # broadcast along sublanes
    o_ref[...] = (recon + kl_ref[0, 0]).astype(o_ref.dtype)


# --------------------------------------------------------------------------
# Lane selection: largest lane = D * k (k | B*S) with lane <= max_lane,
# preferring multiples of 128 (unmasked stores).  lane % D == 0 always, so the
# feature mask is a per-lane constant.
# --------------------------------------------------------------------------
def _pick_lane(feat_dim, bs, max_lane=2048):
    best_any = None
    k_cap = max_lane // feat_dim
    for k in range(min(bs, k_cap), 0, -1):
        if bs % k:
            continue
        lane = feat_dim * k
        if best_any is None:
            best_any = lane
        if lane % 128 == 0:
            return lane
    return best_any if best_any is not None else feat_dim


# ~2 MiB per operand per tile: 3 operands, double-buffered -> ~12 MiB VMEM,
# safely under the default scoped VMEM on v5e (16 MiB), v6e/v7x (32 MiB).
_TARGET_TILE_BYTES = 2 * 1024 * 1024


def kl_loss(inputs, targets, mean, log_var):
    assert inputs.shape == targets.shape
    B, S, D = inputs.shape
    assert D > 2, "feature dim must contain index 2"
    n = B * S * D

    lane = _pick_lane(D, B * S)
    rows = n // lane

    x2 = inputs.reshape(rows, lane)           # native dtype through the DMA
    t2 = targets.reshape(rows, lane)

    # KL scalar with plain jnp (tiny reduction; XLA fuses it).
    mu = mean.astype(jnp.float32)
    lv = log_var.astype(jnp.float32)
    kl = -0.5 * jnp.mean(1.0 + lv - mu * mu - jnp.exp(lv))
    kl_arr = kl.reshape(1, 1)

    # Per-lane feature mask: 1.0 where feature index != 2 (lane % D == 0).
    feat = jnp.arange(lane, dtype=jnp.int32) % D
    mask = (feat != 2).astype(jnp.float32).reshape(1, lane)

    # Row-tile size: ~2 MiB per operand (in the native dtype), multiple of 8
    # sublanes unless the block covers the full row extent; keep at least two
    # roughly even grid steps when rows allow (megacore balance on v7x).
    itemsize = jnp.dtype(inputs.dtype).itemsize
    max_tile = max(8, (_TARGET_TILE_BYTES // (itemsize * lane) // 8) * 8)
    if rows <= 8:
        tile_r = rows
    else:
        half = (((rows + 1) // 2) + 7) // 8 * 8
        tile_r = min(max_tile, half, rows)
    grid = (pl.cdiv(rows, tile_r),)

    out2 = pl.pallas_call(
        _recon_kernel,
        out_shape=jax.ShapeDtypeStruct((rows, lane), inputs.dtype),
        grid=grid,
        in_specs=[
            pl.BlockSpec(memory_space=pltpu.MemorySpace.SMEM),   # kl scalar
            pl.BlockSpec((1, lane), lambda i: (0, 0)),           # mask (resident)
            pl.BlockSpec((tile_r, lane), lambda i: (i, 0)),      # inputs
            pl.BlockSpec((tile_r, lane), lambda i: (i, 0)),      # targets
        ],
        out_specs=pl.BlockSpec((tile_r, lane), lambda i: (i, 0)),
        compiler_params=pltpu.CompilerParams(
            dimension_semantics=("parallel",),   # shard rows across TCs (v7x)
        ),
    )(kl_arr, mask, x2, t2)

    return out2.reshape(B, S, D)


# --------------------------------------------------------------------------
# Pure-JAX reference (matches the PyTorch module with reduction='none').
# --------------------------------------------------------------------------
def kl_loss_ref(inputs, targets, mean, log_var):
    feat_idx = jnp.arange(inputs.shape[-1])
    da_mask = (feat_idx != 2)[None, None, :]
    diff = inputs - targets
    recon = jnp.where(da_mask, diff * diff, 2.0 - 2.0 * jnp.cos(diff))
    kl = -0.5 * jnp.mean(1.0 + log_var - mean * mean - jnp.exp(log_var))
    return recon + kl


if __name__ == "__main__":
    key = jax.random.PRNGKey(0)
    k1, k2, k3, k4 = jax.random.split(key, 4)

    B, S, D = 2, 8, 32     # batch, sequence, feature (feature >= 3 so index 2 exists)
    L = 16                 # latent dim for mean / log_var

    inputs = jax.random.normal(k1, (B, S, D), dtype=jnp.float32)
    targets = jax.random.normal(k2, (B, S, D), dtype=jnp.float32)
    mean = jax.random.normal(k3, (B, L), dtype=jnp.float32)
    log_var = 0.1 * jax.random.normal(k4, (B, L), dtype=jnp.float32)

    out = kl_loss(inputs, targets, mean, log_var)
    out = jax.block_until_ready(out)

    ref = kl_loss_ref(inputs, targets, mean, log_var)
    assert out.shape == (B, S, D)
    assert out.dtype == inputs.dtype
    assert jnp.allclose(out, ref, atol=1e-5, rtol=1e-5), "mismatch vs reference"

    print("KERNEL_OK")
</pallas_src>

<mosaic_0001>
module attributes {stable_mosaic.version = 11 : i64} {
  func.func @_recon_kernel(%arg0: i32, %arg1: memref<1x1xf32, #tpu.memory_space<smem>>, %arg2: memref<1x512xf32, #tpu.memory_space<vmem>>, %arg3: memref<1x512xf32, #tpu.memory_space<vmem>>, %arg4: memref<1x512xf32, #tpu.memory_space<vmem>>, %arg5: memref<1x512xf32, #tpu.memory_space<vmem>>) attributes {dimension_semantics = [#tpu.dimension_semantics<parallel>], iteration_bounds = array<i64: 1>, scalar_prefetch = 0 : i64, scratch_operands = 0 : i64, tpu.core_type = #tpu.core_type<tc>, window_params = [{transform_indices = @transform_0, window_bounds = array<i64: 1, 1>}, {pipeline_mode = #tpu.pipeline_mode<synchronous>, transform_indices = @transform_1, window_bounds = array<i64: 1, 512>}, {transform_indices = @transform_2, window_bounds = array<i64: 1, 512>}, {transform_indices = @transform_3, window_bounds = array<i64: 1, 512>}, {transform_indices = @transform_4, window_bounds = array<i64: 1, 512>}]} {
    %c0 = arith.constant 0 : index
    %c0_0 = arith.constant 0 : index
    %0 = vector.load %arg3[%c0, %c0_0] : memref<1x512xf32, #tpu.memory_space<vmem>>, vector<1x512xf32>
    %c0_1 = arith.constant 0 : index
    %c0_2 = arith.constant 0 : index
    %1 = vector.load %arg4[%c0_1, %c0_2] : memref<1x512xf32, #tpu.memory_space<vmem>>, vector<1x512xf32>
    %2 = arith.subf %0, %1 : vector<1x512xf32>
    %3 = arith.mulf %2, %2 : vector<1x512xf32>
    %4 = math.cos %2 : vector<1x512xf32>
    %cst = arith.constant 2.000000e+00 : f32
    %5 = vector.broadcast %cst : f32 to vector<1x512xf32>
    %6 = arith.mulf %5, %4 : vector<1x512xf32>
    %cst_3 = arith.constant 2.000000e+00 : f32
    %7 = vector.broadcast %cst_3 : f32 to vector<1x512xf32>
    %8 = arith.subf %7, %6 : vector<1x512xf32>
    %c0_4 = arith.constant 0 : index
    %c0_5 = arith.constant 0 : index
    %9 = vector.load %arg2[%c0_4, %c0_5] : memref<1x512xf32, #tpu.memory_space<vmem>>, vector<1x512xf32>
    %cst_6 = arith.constant 0.000000e+00 : f32
    %10 = vector.broadcast %cst_6 : f32 to vector<1x512xf32>
    %11 = arith.cmpf one, %9, %10 : vector<1x512xf32>
    %12 = arith.select %11, %3, %8 : vector<1x512xi1>, vector<1x512xf32>
    %c0_7 = arith.constant 0 : index
    %c0_8 = arith.constant 0 : index
    %13 = memref.load %arg1[%c0_7, %c0_8] : memref<1x1xf32, #tpu.memory_space<smem>>
    %14 = vector.broadcast %13 : f32 to vector<1x512xf32>
    %15 = arith.addf %12, %14 : vector<1x512xf32>
    %c0_9 = arith.constant 0 : index
    %c0_10 = arith.constant 0 : index
    %16 = vector.load %arg5[%c0_9, %c0_10] : memref<1x512xf32, #tpu.memory_space<vmem>>, vector<1x512xf32>
    tpu.vector_store %arg5[%c0_9, %c0_10], %15 {strides = array<i32>} : memref<1x512xf32, #tpu.memory_space<vmem>>, vector<1x512xf32>,
    return
  }
  func.func @transform_0(%arg0: i32) -> (i32, i32) {
    %c0_i32 = arith.constant 0 : i32
    %c0_i32_0 = arith.constant 0 : i32
    %c0_i32_1 = arith.constant 0 : i32
    return %c0_i32, %c0_i32_0 : i32, i32
  }
  func.func @transform_1(%arg0: i32) -> (i32, i32) {
    %c0_i32 = arith.constant 0 : i32
    %c0_i32_0 = arith.constant 0 : i32
    %c0_i32_1 = arith.constant 0 : i32
    return %c0_i32, %c0_i32_0 : i32, i32
  }
  func.func @transform_2(%arg0: i32) -> (i32, i32) {
    %c0_i32 = arith.constant 0 : i32
    %c0_i32_0 = arith.constant 0 : i32
    return %arg0, %c0_i32 : i32, i32
  }
  func.func @transform_3(%arg0: i32) -> (i32, i32) {
    %c0_i32 = arith.constant 0 : i32
    %c0_i32_0 = arith.constant 0 : i32
    return %arg0, %c0_i32 : i32, i32
  }
  func.func @transform_4(%arg0: i32) -> (i32, i32) {
    %c0_i32 = arith.constant 0 : i32
    %c0_i32_0 = arith.constant 0 : i32
    return %arg0, %c0_i32 : i32, i32
  }
}

</mosaic_0001>

<llo_original>
// kernel: tpu_custom_call.1
$region0: #{tpu_custom_call.1}
  #allocation0 [shape = 'u32[]', space=smem, size = 0x4, offset = 0x4, fixed_abs, tag = 'smem constant byte address 0x4 - core index']
  #allocation1 [shape = 'u32[72,128]{1,0:T(1,128)}', space=vmem, size = 0x9000, scoped, tag = 'internal scratch']
  #allocation2 [shape = 'f32[1,1]{1,0:T(1,128)S(6)}', space=smem, size = 0x200, scoped, tag = 'scoped memory for tpu_custom_call.1']
  %s0 = inlined_call_operand.<no memory space> [shape: f32[1,1], index: 0, kind: input, shape index: {}]
  %s1 = inlined_call_operand.hbm [shape: f32[1,512], index: 1, kind: input, shape index: {}]
  %s2 = inlined_call_operand.hbm [shape: f32[1,512], index: 2, kind: input, shape index: {}]
  %s3 = inlined_call_operand.hbm [shape: f32[1,512], index: 3, kind: input, shape index: {}]
  %s4 = inlined_call_operand.hbm [shape: f32[1,512], index: 4, kind: output, shape index: {}]
  %s5 = sld [smem:[#allocation0]]
  $region38: #{tpu_custom_call.1} parent=0
    _
  %s7 = ssub.s32 1, %s5
  %s8 = scalar_select 0, %s7, %s5
  %9 = sst [smem:[#allocation2]] %s0
  $region1: #{tpu_custom_call.1} parent=0
    #allocation3 [shape = 'u8[2048]{0}', space=vmem, size = 0x800, scoped, tag = 'input window, operand 1, single buffered']
    #allocation4 [shape = 's32[1]{0}', space=sflag, size = 0x4, scoped, tag = 'scoped memory for tpu_custom_call.1']
    #allocation5 [shape = 's32[1]{0}', space=sflag, size = 0x4, scoped, tag = 'scoped memory for tpu_custom_call.1']
    #allocation6 [shape = 'u8[2048]{0}', space=vmem, size = 0x800, scoped, tag = 'input window, operand 2, single buffered']
    #allocation7 [shape = 's32[1]{0}', space=sflag, size = 0x4, scoped, tag = 'scoped memory for tpu_custom_call.1']
    #allocation8 [shape = 'u8[2048]{0}', space=vmem, size = 0x800, scoped, tag = 'input window, operand 3, single buffered']
    #allocation9 [shape = 'u8[2048]{0}', space=vmem, size = 0x800, scoped, tag = 'output window, operand 0, single buffered']
    %10 = vsyncpa [#allocation4], 0
    %11 = vsyncpa [#allocation7], 0
    %12 = vsyncpa [#allocation5], 0
    // Predicated region
    $region2: #{tpu_custom_call.1} parent=1 // pred_check
      _
    $region3: #{tpu_custom_call.1} parent=1 // pred_check_branch
      %14 = sbr.rel (0) target = $region5
    $region4: #{tpu_custom_call.1} parent=1 // pred_region
      _
    $region5: #{tpu_custom_call.1} parent=1 // pred_fallthru
      _
    // Predicated region
    $region6: #{tpu_custom_call.1} parent=1 // pred_check
      _
    $region7: #{tpu_custom_call.1} parent=1 // pred_check_branch
      %16 = sbr.rel (0) target = $region9
    $region8: #{tpu_custom_call.1} parent=1 // pred_region
      %18 = vsyncadd [#allocation4], 0
      %s20 = sshll.u32 %s1, 4
      %s21 = int_to_ptr.hbm [resolvable:$true] %s20
      %s22 = sshll.u32 [#allocation3], 4
      %s23 = int_to_ptr.vmem [resolvable:$true] %s22
      %25 = dma.hbm_to_vmem [thread:$0]  %s21, 64, %s23, [#allocation4]
    $region9: #{tpu_custom_call.1} parent=1 // pred_fallthru
      _
    // Predicated region
    $region10: #{tpu_custom_call.1} parent=1 // pred_check
      _
    $region11: #{tpu_custom_call.1} parent=1 // pred_check_branch
      %27 = sbr.rel (0) target = $region13
    $region12: #{tpu_custom_call.1} parent=1 // pred_region
      %29 = vsyncadd [#allocation7], 0
      %s31 = sshll.u32 %s2, 4
      %s32 = int_to_ptr.hbm [resolvable:$true] %s31
      %s33 = sshll.u32 [#allocation6], 4
      %s34 = int_to_ptr.vmem [resolvable:$true] %s33
      %36 = dma.hbm_to_vmem [thread:$0]  %s32, 64, %s34, [#allocation7]
    $region13: #{tpu_custom_call.1} parent=1 // pred_fallthru
      _
    // Predicated region
    $region14: #{tpu_custom_call.1} parent=1 // pred_check
      _
    $region15: #{tpu_custom_call.1} parent=1 // pred_check_branch
      %38 = sbr.rel (0) target = $region17
    $region16: #{tpu_custom_call.1} parent=1 // pred_region
      %40 = vsyncadd [#allocation7], 0
      %s42 = sshll.u32 %s3, 4
      %s43 = int_to_ptr.hbm [resolvable:$true] %s42
      %s44 = sshll.u32 [#allocation8], 4
      %s45 = int_to_ptr.vmem [resolvable:$true] %s44
      %47 = dma.hbm_to_vmem [thread:$0]  %s43, 64, %s45, [#allocation7]
    $region17: #{tpu_custom_call.1} parent=1 // pred_fallthru
      _
    // Predicated region
    $region18: #{tpu_custom_call.1} parent=1 // pred_check
      _
    $region19: #{tpu_custom_call.1} parent=1 // pred_check_branch
      %49 = sbr.rel (0) target = $region21
    $region20: #{tpu_custom_call.1} parent=1 // pred_region
      %51 = dma.done [#allocation4], 64
    $region21: #{tpu_custom_call.1} parent=1 // pred_fallthru
      _
    // Predicated region
    $region22: #{tpu_custom_call.1} parent=1 // pred_check
      _
    $region23: #{tpu_custom_call.1} parent=1 // pred_check_branch
      %53 = sbr.rel (0) target = $region25
    $region24: #{tpu_custom_call.1} parent=1 // pred_region
      %55 = dma.done [#allocation7], 64
    $region25: #{tpu_custom_call.1} parent=1 // pred_fallthru
      _
    // Predicated region
    $region26: #{tpu_custom_call.1} parent=1 // pred_check
      _
    $region27: #{tpu_custom_call.1} parent=1 // pred_check_branch
      %57 = sbr.rel (0) target = $region29
    $region28: #{tpu_custom_call.1} parent=1 // pred_region
      %59 = dma.done [#allocation7], 64
    $region29: #{tpu_custom_call.1} parent=1 // pred_fallthru
      _
    %v60 = vld [vmem:[#allocation6] sm:$0xf]
    %v61 = vld [vmem:[#allocation8] sm:$0xf]
    %v62 = vsub.f32 %v60, %v61
    %v63 = vmul.f32 %v62, %v62
    %v64 = vand.u32 2147483647, %v62
    %vm65 = vcmp.le.f32.partialorder %v64, 0.7853982
    %vm66 = vcmp.lt.s32.totalorder %v62, 0
    %v67 = vand.u32 %v62, 2139095040
    %v68 = vshrl.u32 %v67, 23
    %v69 = vsub.s32 %v68, 127
    %v70 = vand.u32 2147483647, %v62
    %v71 = vand.u32 %v70, 8388607
    %v72 = vor.u32 %v71, 8388608
    %v73 = vsub.s32 0, %v72
    %v74 = vadd.s32 %v69, 1
    %vm75 = vcmp.gt.s32.totalorder %v74, 0
    %v76 = vsel %vm75, %v74, 0
    %v77 = vshrl.u32 %v76, 5
    %v78 = vand.u32 %v76, 31
    %v79 = vsub.s32 32, %v78
    %v80 = vshrl.u32 683565275, %v79
    %v81 = vshll.u32 683565275, %v78
    %v82 = vshrl.u32 2475754826, %v79
    %v83 = vor.u32 %v81, %v82
    %v84 = vshll.u32 2475754826, %v78
    %v85 = vshrl.u32 2131351028, %v79
    %v86 = vor.u32 %v84, %v85
    %v87 = vshll.u32 2131351028, %v78
    %v88 = vshrl.u32 2102212464, %v79
    %v89 = vor.u32 %v87, %v88
    %v90 = vshll.u32 2102212464, %v78
    %v91 = vshrl.u32 920167782, %v79
    %v92 = vor.u32 %v90, %v91
    %v93 = vshll.u32 920167782, %v78
    %v94 = vshrl.u32 1326507024, %v79
    %v95 = vor.u32 %v93, %v94
    %vm96 = vcmp.lt.s32.totalorder %v77, 1
    %vm97 = vcmp.lt.s32.totalorder %v77, 2
    %vm98 = vcmp.lt.s32.totalorder %v77, 3
    %vm99 = vcmp.lt.s32.totalorder %v77, 4
    %v100 = vsel %vm96, %v80, %v83
    %v101 = vsel %vm99, %v89, 2102212464
    %v102 = vsel %vm98, %v86, %v101
    %v103 = vsel %vm97, %v100, %v102
    %v104 = vsel %vm96, %v83, %v86
    %v105 = vsel %vm99, %v92, 920167782
    %v106 = vsel %vm98, %v89, %v105
    %v107 = vsel %vm97, %v104, %v106
    %v108 = vsel %vm96, %v86, %v89
    %v109 = vsel %vm99, %v95, 1326507024
    %v110 = vsel %vm98, %v92, %v109
    %v111 = vsel %vm97, %v108, %v110
    %v112 = vshll.u32 %v72, 8
    %v113 = vand.u32 %v112, 65535
    %v114 = vshrl.u32 %v112, 16
    %v115 = vand.u32 %v111, 65535
    %v116 = vshrl.u32 %v111, 16
    %v117 = vmul.u32 %v113, %v115
    %v118 = vmul.u32 %v113, %v116
    %v119 = vmul.u32 %v114, %v115
    %v120 = vmul.u32 %v114, %v116
    %v121 = vshll.u32 %v118, 16
    %v122 = vshrl.u32 %v118, 16
    %v123 = vshll.u32 %v119, 16
    %v124 = vshrl.u32 %v119, 16
    %vm125 = vc.u32 %v117, %v121
    %v126 = vsel %vm125, 1, 0
    %v127 = vadd.s32 %v117, %v121
    %v128 = vadd.s32 %v120, %v126
    %vm129 = vc.u32 %v127, %v123
    %v130 = vsel %vm129, 1, 0
    %v131 = vadd.s32 %v127, %v123
    %v132 = vadd.s32 %v128, %v130
    %v133 = vadd.s32 %v132, %v122
    %v134 = vadd.s32 %v133, %v124
    %v135 = vand.u32 %v112, 65535
    %v136 = vshrl.u32 %v112, 16
    %v137 = vand.u32 %v107, 65535
    %v138 = vshrl.u32 %v107, 16
    %v139 = vmul.u32 %v135, %v137
    %v140 = vmul.u32 %v135, %v138
    %v141 = vmul.u32 %v136, %v137
    %v142 = vmul.u32 %v136, %v138
    %v143 = vshll.u32 %v140, 16
    %v144 = vshrl.u32 %v140, 16
    %v145 = vshll.u32 %v141, 16
    %v146 = vshrl.u32 %v141, 16
    %vm147 = vc.u32 %v139, %v143
    %v148 = vsel %vm147, 1, 0
    %v149 = vadd.s32 %v139, %v143
    %v150 = vadd.s32 %v142, %v148
    %vm151 = vc.u32 %v149, %v145
    %v152 = vsel %vm151, 1, 0
    %v153 = vadd.s32 %v149, %v145
    %v154 = vadd.s32 %v150, %v152
    %v155 = vadd.s32 %v154, %v144
    %v156 = vadd.s32 %v155, %v146
    %v157 = vmul.u32 %v112, %v103
    %v158 = vadd.s32 %v134, %v153
    %vm159 = vc.u32 %v134, %v153
    %v160 = vadd.s32 %v156, 1
    %v161 = vsel %vm159, %v160, %v156
    %v162 = vadd.s32 %v157, %v161
    %v163 = vadd.s32 %v162, 536870912
    %v164 = vshrl.u32 %v163, 30
    %v165 = vshll.u32 %v164, 30
    %v166 = vsub.s32 %v162, %v165
    %vm167 = vcmp.lt.s32.totalorder %v166, 0
    %v168 = vsub.s32 0, %v166
    %v169 = vsel %vm167, %v168, %v166
    %v170 = vclz %v169
    %v171 = vsub.s32 %v170, 2
    %vm172 = vcmp.gt.s32.totalorder 0, %v171
    %v173 = vsel %vm172, 0, %v171
    %v174 = vsub.s32 32, %v173
    %v175 = vshll.u32 %v166, %v173
    %v176 = vshrl.u32 %v158, %v174
    %v177 = vor.u32 %v175, %v176
    %v178 = vsub.s32 4294967266, %v173
    %v179 = vadd.s32 %v178, 127
    %v180 = vshll.u32 %v179, 23
    %v181 = vor.u32 4788187, %v180
    %v182 = vand.u32 2147483647, %v181
    %v184 = vcvt.s32.f32 %v177
    %v185 = vmul.f32 %v184, %v182
    %v186 = vxor.u32 %v185, 2147483648
    %v187 = vsel %vm66, %v186, %v185
    %v188 = vsub.s32 4, %v164
    %v189 = vsel %vm66, %v188, %v164
    %v190 = vsel %vm65, %v62, %v187
    %v191 = vsel %vm65, 0, %v189
    %v192 = vmul.f32 %v190, %v190
    %v193 = vmul.f32 %v192, -0.001358992
    %v194 = vadd.f32 %v193, 0.041655596
    %v195 = vmul.f32 %v192, %v194
    %v196 = vadd.f32 %v195, -0.4999988
    %v197 = vmul.f32 %v192, %v196
    %v198 = vadd.f32 1.0, %v197
    %v199 = vmul.f32 %v190, %v190
    %v200 = vmul.f32 %v199, -0.00019511016
    %v201 = vadd.f32 %v200, 0.008332121
    %v202 = vmul.f32 %v199, %v201
    %v203 = vadd.f32 %v202, -0.16666654
    %v204 = vmul.f32 %v199, %v203
    %v205 = vadd.f32 %v204, 1.0
    %v206 = vmul.f32 %v205, %v190
    %vm207 = vweird.f32 %v62
    %v208 = vand.u32 %v191, 3
    %vm209 = vcmp.lt.s32.totalorder %v208, 2
    %vm210 = vcmp.eq.s32.totalorder %v208, 0
    %v211 = vxor.u32 %v206, 2147483648
    %v212 = vsel %vm210, %v198, %v211
    %vm213 = vcmp.eq.s32.totalorder %v208, 2
    %v214 = vxor.u32 %v198, 2147483648
    %v215 = vsel %vm213, %v214, %v206
    %v216 = vsel %vm209, %v212, %v215
    %v217 = vsel %vm207, nan, %v216
    %v218 = vmul.f32 %v217, 2.0
    %v219 = vsub.f32 2.0, %v218
    %v220 = vld [vmem:[#allocation3] sm:$0xf]
    %vm221 = vcmp.ne.f32.partialorder %v220, 0.0
    %v222 = vsel %vm221, %v63, %v219
    %s223 = sld [smem:[#allocation2]]
    %v224 = vstv %s223
    %v225 = vadd.f32 %v222, %v224
    %v226 = vlaneseq
    %vm227 = vcmp.ge.s32.totalorder %v226, 0
    %vm228 = vcmp.lt.s32.totalorder %v226, 512
    %vm229 = vmand %vm227, %vm228
    %230 = vst.msk [vmem:[#allocation9] sm:$0xf] %vm229, %v225
    // Predicated region
    $region30: #{tpu_custom_call.1} parent=1 // pred_check
      _
    $region31: #{tpu_custom_call.1} parent=1 // pred_check_branch
      %232 = sbr.rel (0) target = $region33
    $region32: #{tpu_custom_call.1} parent=1 // pred_region
      %234 = vsyncadd [#allocation5], 0
      %s236 = sshll.u32 [#allocation9], 4
      %s237 = int_to_ptr.vmem [resolvable:$true] %s236
      %s238 = sshll.u32 %s4, 4
      %s239 = int_to_ptr.hbm [resolvable:$true] %s238
      %241 = dma.vmem_to_hbm [thread:$0]  %s237, 64, %s239, [#allocation5]
    $region33: #{tpu_custom_call.1} parent=1 // pred_fallthru
      _
    // Predicated region
    $region34: #{tpu_custom_call.1} parent=1 // pred_check
      _
    $region35: #{tpu_custom_call.1} parent=1 // pred_check_branch
      %243 = sbr.rel (0) target = $region37
    $region36: #{tpu_custom_call.1} parent=1 // pred_region
      %245 = dma.done [#allocation5], 64
    $region37: #{tpu_custom_call.1} parent=1 // pred_fallthru
      _
    %246 = vsyncpa [#allocation4], 1
    %247 = vsyncpa [#allocation7], 1
    %248 = vsyncpa [#allocation5], 1

</llo_original>
